<compile_context>
chip_gen: v7x
topology: tpu7x:2x2x1
jax: 0.10.0
libtpu: 0.0.40
codegen_flags: <defaults>
</compile_context>

<pallas_src>
import functools

import jax
import jax.numpy as jnp
from jax.experimental import pallas as pl
from jax.experimental.pallas import tpu as pltpu

HIDDEN = 128
LANE = 128


def _round_up(v, m):
    return (v + m - 1) // m * m


def dqn_kernel(x_ref, w1_ref, b1_ref, w2_ref, b2_ref, o_ref):
    # fc1: (TILE_B, Din) @ (Din, 128) on the MXU, f32 accumulation.
    h = jnp.dot(x_ref[...], w1_ref[...], preferred_element_type=jnp.float32)
    # bias + ReLU in f32 on the VPU (v5e has no bf16 VPU).
    h = jnp.maximum(h + b1_ref[...], jnp.float32(0.0))
    # fc2: (TILE_B, 128) @ (128, Npad) on the MXU, f32 accumulation.
    q = jnp.dot(h.astype(w2_ref.dtype), w2_ref[...],
                preferred_element_type=jnp.float32)
    q = q + b2_ref[...]
    # Lane-dense (Npad is a multiple of 128) unmasked store.
    o_ref[...] = q.astype(o_ref.dtype)


@functools.partial(jax.jit, static_argnames=("tile_b", "use_bf16"))
def deep_q_network(x, w1, b1, w2, b2, *, tile_b=256, use_bf16=True):
    """Forward pass of DeepQNetwork.

    x:  (B, num_inputs) float32
    w1: (num_inputs, 128) float32, b1: (1, 128) float32
    w2: (128, num_outputs) float32, b2: (1, num_outputs) float32
    returns (B, num_outputs) float32
    """
    B, num_inputs = x.shape
    hidden, num_outputs = w2.shape
    assert hidden == HIDDEN and w1.shape == (num_inputs, HIDDEN)

    # --- lane-dense output: pad output columns to a multiple of 128 ---------
    n_pad = _round_up(num_outputs, LANE)
    if n_pad != num_outputs:
        w2 = jnp.pad(w2, ((0, 0), (0, n_pad - num_outputs)))
        b2 = jnp.pad(b2, ((0, 0), (0, n_pad - num_outputs)))

    # --- batch tiling: clamp tile to batch, pad batch to a tile multiple ----
    tb = min(tile_b, _round_up(B, 8))          # sublane-aligned tile
    b_pad = _round_up(B, tb)
    if b_pad != B:
        x = jnp.pad(x, ((0, b_pad - B), (0, 0)))
    grid = (b_pad // tb,)

    # --- bf16 MXU inputs, f32 accumulation / biases --------------------------
    if use_bf16:
        x_mx = x.astype(jnp.bfloat16)
        w1_mx = w1.astype(jnp.bfloat16)
        w2_mx = w2.astype(jnp.bfloat16)
    else:
        x_mx, w1_mx, w2_mx = x, w1, w2
    b1 = b1.astype(jnp.float32)
    b2 = b2.astype(jnp.float32)

    out_padded = pl.pallas_call(
        dqn_kernel,
        out_shape=jax.ShapeDtypeStruct((b_pad, n_pad), jnp.float32),
        grid=grid,
        in_specs=[
            pl.BlockSpec((tb, num_inputs), lambda i: (i, 0)),     # x tile
            pl.BlockSpec((num_inputs, HIDDEN), lambda i: (0, 0)), # w1 resident
            pl.BlockSpec((1, HIDDEN), lambda i: (0, 0)),          # b1 resident
            pl.BlockSpec((HIDDEN, n_pad), lambda i: (0, 0)),      # w2 resident
            pl.BlockSpec((1, n_pad), lambda i: (0, 0)),           # b2 resident
        ],
        out_specs=pl.BlockSpec((tb, n_pad), lambda i: (i, 0)),
        compiler_params=pltpu.CompilerParams(
            dimension_semantics=("parallel",),
        ),
    )(x_mx, w1_mx, b1, w2_mx, b2)

    return out_padded[:B, :num_outputs]


def init_params(key, num_inputs, num_outputs, hidden=HIDDEN):
    """Deterministic init mirroring nn.Linear default: U(-1/sqrt(fan_in), +1/sqrt(fan_in))."""
    k1, k2, k3, k4 = jax.random.split(key, 4)
    bound1 = 1.0 / jnp.sqrt(jnp.float32(num_inputs))
    bound2 = 1.0 / jnp.sqrt(jnp.float32(hidden))
    w1 = jax.random.uniform(k1, (num_inputs, hidden), jnp.float32, -bound1, bound1)
    b1 = jax.random.uniform(k2, (1, hidden), jnp.float32, -bound1, bound1)
    w2 = jax.random.uniform(k3, (hidden, num_outputs), jnp.float32, -bound2, bound2)
    b2 = jax.random.uniform(k4, (1, num_outputs), jnp.float32, -bound2, bound2)
    return w1, b1, w2, b2


if __name__ == "__main__":
    key = jax.random.PRNGKey(0)
    kx, kp = jax.random.split(key)

    B, num_inputs, num_outputs = 8, 16, 4
    x = jax.random.normal(kx, (B, num_inputs), jnp.float32)
    w1, b1, w2, b2 = init_params(kp, num_inputs, num_outputs)

    out = deep_q_network(x, w1, b1, w2, b2)
    out = jax.block_until_ready(out)

    # Reference in plain JAX (same math as the PyTorch module), f32 end-to-end.
    ref = jnp.maximum(x @ w1 + b1, 0.0) @ w2 + b2
    assert out.shape == (B, num_outputs)
    # bf16 MXU inputs -> loosened tolerance vs the f32 reference.
    assert jnp.allclose(out, ref, atol=2e-2, rtol=2e-2), (
        jnp.max(jnp.abs(out - ref)))

    # Also exercise the pure-f32 path at the tight tolerance.
    out_f32 = jax.block_until_ready(
        deep_q_network(x, w1, b1, w2, b2, use_bf16=False))
    assert jnp.allclose(out_f32, ref, atol=1e-5, rtol=1e-5)

    print("KERNEL_OK")
</pallas_src>

<mosaic_0001>
module attributes {stable_mosaic.version = 11 : i64} {
  func.func @dqn_kernel(%arg0: i32, %arg1: memref<8x16xbf16, #tpu.memory_space<vmem>>, %arg2: memref<16x128xbf16, #tpu.memory_space<vmem>>, %arg3: memref<1x128xf32, #tpu.memory_space<vmem>>, %arg4: memref<128x128xbf16, #tpu.memory_space<vmem>>, %arg5: memref<1x128xf32, #tpu.memory_space<vmem>>, %arg6: memref<8x128xf32, #tpu.memory_space<vmem>>) attributes {dimension_semantics = [#tpu.dimension_semantics<parallel>], iteration_bounds = array<i64: 1>, scalar_prefetch = 0 : i64, scratch_operands = 0 : i64, tpu.core_type = #tpu.core_type<tc>, window_params = [{transform_indices = @transform_0, window_bounds = array<i64: 8, 16>}, {pipeline_mode = #tpu.pipeline_mode<synchronous>, transform_indices = @transform_1, window_bounds = array<i64: 16, 128>}, {pipeline_mode = #tpu.pipeline_mode<synchronous>, transform_indices = @transform_2, window_bounds = array<i64: 1, 128>}, {pipeline_mode = #tpu.pipeline_mode<synchronous>, transform_indices = @transform_3, window_bounds = array<i64: 128, 128>}, {pipeline_mode = #tpu.pipeline_mode<synchronous>, transform_indices = @transform_4, window_bounds = array<i64: 1, 128>}, {transform_indices = @transform_5, window_bounds = array<i64: 8, 128>}]} {
    %c0 = arith.constant 0 : index
    %c0_0 = arith.constant 0 : index
    %0 = vector.load %arg1[%c0, %c0_0] : memref<8x16xbf16, #tpu.memory_space<vmem>>, vector<8x16xbf16>
    %c0_1 = arith.constant 0 : index
    %c0_2 = arith.constant 0 : index
    %1 = vector.load %arg2[%c0_1, %c0_2] : memref<16x128xbf16, #tpu.memory_space<vmem>>, vector<16x128xbf16>
    %cst = arith.constant dense<0.000000e+00> : vector<8x128xf32>
    %2 = tpu.matmul %0, %1, %cst {dimension_numbers = #tpu.dot_dimension_numbers<[1], [0], [0], [1], [0, 0, 1, 1], [], []>} : vector<8x16xbf16>, vector<16x128xbf16>, vector<8x128xf32> -> vector<8x128xf32>
    %c0_3 = arith.constant 0 : index
    %c0_4 = arith.constant 0 : index
    %3 = vector.load %arg3[%c0_3, %c0_4] : memref<1x128xf32, #tpu.memory_space<vmem>>, vector<1x128xf32>
    %4 = vector.broadcast %3 : vector<1x128xf32> to vector<8x128xf32>
    %5 = arith.addf %2, %4 : vector<8x128xf32>
    %cst_5 = arith.constant 0.000000e+00 : f32
    %6 = vector.broadcast %cst_5 : f32 to vector<8x128xf32>
    %7 = arith.maximumf %5, %6 : vector<8x128xf32>
    %8 = arith.truncf %7 : vector<8x128xf32> to vector<8x128xbf16>
    %c0_6 = arith.constant 0 : index
    %c0_7 = arith.constant 0 : index
    %9 = vector.load %arg4[%c0_6, %c0_7] : memref<128x128xbf16, #tpu.memory_space<vmem>>, vector<128x128xbf16>
    %cst_8 = arith.constant dense<0.000000e+00> : vector<8x128xf32>
    %10 = tpu.matmul %8, %9, %cst_8 {dimension_numbers = #tpu.dot_dimension_numbers<[1], [0], [0], [1], [0, 0, 1, 1], [], []>} : vector<8x128xbf16>, vector<128x128xbf16>, vector<8x128xf32> -> vector<8x128xf32>
    %c0_9 = arith.constant 0 : index
    %c0_10 = arith.constant 0 : index
    %11 = vector.load %arg5[%c0_9, %c0_10] : memref<1x128xf32, #tpu.memory_space<vmem>>, vector<1x128xf32>
    %12 = vector.broadcast %11 : vector<1x128xf32> to vector<8x128xf32>
    %13 = arith.addf %10, %12 : vector<8x128xf32>
    %c0_11 = arith.constant 0 : index
    %c0_12 = arith.constant 0 : index
    %14 = vector.load %arg6[%c0_11, %c0_12] : memref<8x128xf32, #tpu.memory_space<vmem>>, vector<8x128xf32>
    tpu.vector_store %arg6[%c0_11, %c0_12], %13 {strides = array<i32>} : memref<8x128xf32, #tpu.memory_space<vmem>>, vector<8x128xf32>,
    return
  }
  func.func @transform_0(%arg0: i32) -> (i32, i32) {
    %c0_i32 = arith.constant 0 : i32
    %c0_i32_0 = arith.constant 0 : i32
    return %arg0, %c0_i32 : i32, i32
  }
  func.func @transform_1(%arg0: i32) -> (i32, i32) {
    %c0_i32 = arith.constant 0 : i32
    %c0_i32_0 = arith.constant 0 : i32
    %c0_i32_1 = arith.constant 0 : i32
    return %c0_i32, %c0_i32_0 : i32, i32
  }
  func.func @transform_2(%arg0: i32) -> (i32, i32) {
    %c0_i32 = arith.constant 0 : i32
    %c0_i32_0 = arith.constant 0 : i32
    %c0_i32_1 = arith.constant 0 : i32
    return %c0_i32, %c0_i32_0 : i32, i32
  }
  func.func @transform_3(%arg0: i32) -> (i32, i32) {
    %c0_i32 = arith.constant 0 : i32
    %c0_i32_0 = arith.constant 0 : i32
    %c0_i32_1 = arith.constant 0 : i32
    return %c0_i32, %c0_i32_0 : i32, i32
  }
  func.func @transform_4(%arg0: i32) -> (i32, i32) {
    %c0_i32 = arith.constant 0 : i32
    %c0_i32_0 = arith.constant 0 : i32
    %c0_i32_1 = arith.constant 0 : i32
    return %c0_i32, %c0_i32_0 : i32, i32
  }
  func.func @transform_5(%arg0: i32) -> (i32, i32) {
    %c0_i32 = arith.constant 0 : i32
    %c0_i32_0 = arith.constant 0 : i32
    return %arg0, %c0_i32 : i32, i32
  }
}

</mosaic_0001>

<llo_original>
// kernel: deep_q_network.1
$region0: #{deep_q_network.1}
  #allocation0 [shape = 'u32[]', space=smem, size = 0x4, offset = 0x4, fixed_abs, tag = 'smem constant byte address 0x4 - core index']
  #allocation1 [shape = 'u32[144,128]{1,0:T(1,128)}', space=vmem, size = 0x12000, scoped, tag = 'internal scratch']
  %s0 = inlined_call_operand.vmem [shape: bf16[8,16], index: 0, kind: input, shape index: {}]
  %s1 = inlined_call_operand.vmem [shape: bf16[16,128], index: 1, kind: input, shape index: {}]
  %s2 = inlined_call_operand.vmem [shape: f32[1,128], index: 2, kind: input, shape index: {}]
  %s3 = inlined_call_operand.vmem [shape: bf16[128,128], index: 3, kind: input, shape index: {}]
  %s4 = inlined_call_operand.vmem [shape: f32[1,128], index: 4, kind: input, shape index: {}]
  %s5 = inlined_call_operand.vmem [shape: f32[8,128], index: 5, kind: output, shape index: {}]
  %s6 = sld [smem:[#allocation0]]
  $region30: #{deep_q_network.1} parent=0
    _
  %s8 = ssub.s32 1, %s6
  %s9 = scalar_select 0, %s8, %s6
  // Predicated region
  $region2: #{deep_q_network.1} parent=0 // pred_check
    _
  $region3: #{deep_q_network.1} parent=0 // pred_check_branch
    %11 = sbr.rel (0) target = $region5
  $region4: #{deep_q_network.1} parent=0 // pred_region
    _
  $region5: #{deep_q_network.1} parent=0 // pred_fallthru
    _
  // Predicated region
  $region6: #{deep_q_network.1} parent=0 // pred_check
    _
  $region7: #{deep_q_network.1} parent=0 // pred_check_branch
    %13 = sbr.rel (0) target = $region9
  $region8: #{deep_q_network.1} parent=0 // pred_region
    _
  $region9: #{deep_q_network.1} parent=0 // pred_fallthru
    _
  // Predicated region
  $region10: #{deep_q_network.1} parent=0 // pred_check
    _
  $region11: #{deep_q_network.1} parent=0 // pred_check_branch
    %15 = sbr.rel (0) target = $region13
  $region12: #{deep_q_network.1} parent=0 // pred_region
    _
  $region13: #{deep_q_network.1} parent=0 // pred_fallthru
    _
  // Predicated region
  $region14: #{deep_q_network.1} parent=0 // pred_check
    _
  $region15: #{deep_q_network.1} parent=0 // pred_check_branch
    %17 = sbr.rel (0) target = $region17
  $region16: #{deep_q_network.1} parent=0 // pred_region
    _
  $region17: #{deep_q_network.1} parent=0 // pred_fallthru
    _
  // Predicated region
  $region18: #{deep_q_network.1} parent=0 // pred_check
    _
  $region19: #{deep_q_network.1} parent=0 // pred_check_branch
    %19 = sbr.rel (0) target = $region21
  $region20: #{deep_q_network.1} parent=0 // pred_region
    _
  $region21: #{deep_q_network.1} parent=0 // pred_fallthru
    _
  %v21 = vld [vmem:[%s0] sm:$0xf]
  %v22 = vld [vmem:[%s1] sm:$0xf]
  %v23 = vld [vmem:[%s1 + $0x4] sm:$0xf]
  %v24 = vld [vmem:[%s2] sm:$0x1]
  %v26 = vlaneseq
  %v27 = vshrl.u32 %v26, 7
  %v28 = vsub.s32 0, %v27
  %v29 = vrot.slane %v24, %v28
  %v33 = vunpack.c.l.b16 %v22
  %v34 = vunpack.c.l.b16 %v23
  %v35 = vpack.c.b16 %v34, %v33
  %vm37 = vcmask 130048
  %v39 = vsel %vm37, %v21, 0
  %41 = vmatprep.subr.bf16.mxu0 0
  %42 = vmatpush1.bf16.msra.mxu0 %v35
  %43 = vmatprep.subr.bf16.mxu0 0
  %44 = vmatpush1.bf16.msra.mxu0 0
  %45 = vmatprep.subr.bf16.mxu0 0
  %46 = vmatpush1.bf16.msra.mxu0 0
  %47 = vmatprep.subr.bf16.mxu0 0
  %48 = vmatpush1.bf16.msra.mxu0 0
  %49 = vmatprep.subr.bf16.mxu0 0
  %50 = vmatpush1.bf16.msra.mxu0 0
  %51 = vmatprep.subr.bf16.mxu0 0
  %52 = vmatpush1.bf16.msra.mxu0 0
  %53 = vmatprep.subr.bf16.mxu0 0
  %54 = vmatpush1.bf16.msra.mxu0 0
  %55 = vmatprep.subr.bf16.mxu0 0
  %56 = vmatpush1.bf16.msra.mxu0 0
  %57 = vmatprep.subr.bf16.mxu0 0
  %58 = vmatpush1.bf16.msra.mxu0 0
  %59 = vmatprep.subr.bf16.mxu0 0
  %60 = vmatpush1.bf16.msra.mxu0 0
  %61 = vmatprep.subr.bf16.mxu0 0
  %62 = vmatpush1.bf16.msra.mxu0 0
  %63 = vmatprep.subr.bf16.mxu0 0
  %64 = vmatpush1.bf16.msra.mxu0 0
  %65 = vmatprep.subr.bf16.mxu0 0
  %66 = vmatpush1.bf16.msra.mxu0 0
  %67 = vmatprep.subr.bf16.mxu0 0
  %68 = vmatpush1.bf16.msra.mxu0 0
  %69 = vmatprep.subr.bf16.mxu0 0
  %70 = vmatpush1.bf16.msra.mxu0 0
  %71 = vmatprep.subr.bf16.mxu0 0
  %72 = vmatpush1.bf16.msra.mxu0 0
  %73 = vmatprep.mubr.bf16.mxu0 0
  %74 = vmatmul.mubr.bf16.gmra.mrb[0].mxu0 %v39
  %v75 = vpop.f32.mrb[0].mxu0
  %v76 = vadd.f32 %v29, %v75
  %v77 = vpop.f32.mrb[0].mxu0
  %v78 = vpop.f32.mrb[0].mxu0
  %v79 = vpop.f32.mrb[0].mxu0
  %80 = vdwg.mxu0
  %v81 = vmax.f32 %v76, 0.0
  %v82 = vpack.c.bf16 %v81, %v81
  %v83 = vld [vmem:[%s3] sm:$0xf]
  %v84 = vld [vmem:[%s3 + $0x4] sm:$0xf]
  %v85 = vld [vmem:[%s3 + $0x8] sm:$0xf]
  %v86 = vld [vmem:[%s3 + $0xc] sm:$0xf]
  %v87 = vld [vmem:[%s3 + $0x10] sm:$0xf]
  %v88 = vld [vmem:[%s3 + $0x14] sm:$0xf]
  %v89 = vld [vmem:[%s3 + $0x18] sm:$0xf]
  %v90 = vld [vmem:[%s3 + $0x1c] sm:$0xf]
  %v91 = vld [vmem:[%s3 + $0x20] sm:$0xf]
  %v92 = vld [vmem:[%s3 + $0x24] sm:$0xf]
  %v93 = vld [vmem:[%s3 + $0x28] sm:$0xf]
  %v94 = vld [vmem:[%s3 + $0x2c] sm:$0xf]
  %v95 = vld [vmem:[%s3 + $0x30] sm:$0xf]
  %v96 = vld [vmem:[%s3 + $0x34] sm:$0xf]
  %v97 = vld [vmem:[%s3 + $0x38] sm:$0xf]
  %v98 = vld [vmem:[%s3 + $0x3c] sm:$0xf]
  %v99 = vld [vmem:[%s4] sm:$0x1]
  %v101 = vlaneseq
  %v102 = vshrl.u32 %v101, 7
  %v103 = vsub.s32 0, %v102
  %v104 = vrot.slane %v99, %v103
  %v122 = vunpack.c.l.b16 %v83
  %v123 = vunpack.c.l.b16 %v84
  %v124 = vunpack.c.l.b16 %v85
  %v125 = vunpack.c.l.b16 %v86
  %v126 = vunpack.c.l.b16 %v87
  %v127 = vunpack.c.l.b16 %v88
  %v128 = vunpack.c.l.b16 %v89
  %v129 = vunpack.c.l.b16 %v90
  %v130 = vunpack.c.l.b16 %v91
  %v131 = vunpack.c.l.b16 %v92
  %v132 = vunpack.c.l.b16 %v93
  %v133 = vunpack.c.l.b16 %v94
  %v134 = vunpack.c.l.b16 %v95
  %v135 = vunpack.c.l.b16 %v96
  %v136 = vunpack.c.l.b16 %v97
  %v137 = vunpack.c.l.b16 %v98
  %v138 = vpack.c.b16 %v123, %v122
  %v139 = vpack.c.b16 %v125, %v124
  %v140 = vpack.c.b16 %v127, %v126
  %v141 = vpack.c.b16 %v129, %v128
  %v142 = vpack.c.b16 %v131, %v130
  %v143 = vpack.c.b16 %v133, %v132
  %v144 = vpack.c.b16 %v135, %v134
  %v145 = vpack.c.b16 %v137, %v136
  %154 = vmatprep.subr.bf16.mxu0 0
  %155 = vmatpush1.bf16.msra.mxu0 %v138
  %156 = vmatprep.subr.bf16.mxu0 0
  %157 = vmatpush1.bf16.msra.mxu0 %v139
  %158 = vmatprep.subr.bf16.mxu0 0
  %159 = vmatpush1.bf16.msra.mxu0 %v140
  %160 = vmatprep.subr.bf16.mxu0 0
  %161 = vmatpush1.bf16.msra.mxu0 %v141
  %162 = vmatprep.subr.bf16.mxu0 0
  %163 = vmatpush1.bf16.msra.mxu0 %v142
  %164 = vmatprep.subr.bf16.mxu0 0
  %165 = vmatpush1.bf16.msra.mxu0 %v143
  %166 = vmatprep.subr.bf16.mxu0 0
  %167 = vmatpush1.bf16.msra.mxu0 %v144
  %168 = vmatprep.subr.bf16.mxu0 0
  %169 = vmatpush1.bf16.msra.mxu0 %v145
  %170 = vmatprep.subr.bf16.mxu0 0
  %171 = vmatpush1.bf16.msra.mxu0 0
  %172 = vmatprep.subr.bf16.mxu0 0
  %173 = vmatpush1.bf16.msra.mxu0 0
  %174 = vmatprep.subr.bf16.mxu0 0
  %175 = vmatpush1.bf16.msra.mxu0 0
  %176 = vmatprep.subr.bf16.mxu0 0
  %177 = vmatpush1.bf16.msra.mxu0 0
  %178 = vmatprep.subr.bf16.mxu0 0
  %179 = vmatpush1.bf16.msra.mxu0 0
  %180 = vmatprep.subr.bf16.mxu0 0
  %181 = vmatpush1.bf16.msra.mxu0 0
  %182 = vmatprep.subr.bf16.mxu0 0
  %183 = vmatpush1.bf16.msra.mxu0 0
  %184 = vmatprep.subr.bf16.mxu0 0
  %185 = vmatpush1.bf16.msra.mxu0 0
  %186 = vmatprep.mubr.bf16.mxu0 0
  %187 = vmatmul.mubr.bf16.gmra.mrb[0].mxu0 %v82
  %v188 = vpop.f32.mrb[0].mxu0
  %v189 = vadd.f32 %v104, %v188
  %v190 = vpop.f32.mrb[0].mxu0
  %v191 = vpop.f32.mrb[0].mxu0
  %v192 = vpop.f32.mrb[0].mxu0
  %193 = vdwg.mxu0
  %194 = vst [vmem:[%s5] sm:$0xff] %v189
  // Predicated region
  $region22: #{deep_q_network.1} parent=0 // pred_check
    _
  $region23: #{deep_q_network.1} parent=0 // pred_check_branch
    %196 = sbr.rel (0) target = $region25
  $region24: #{deep_q_network.1} parent=0 // pred_region
    _
  $region25: #{deep_q_network.1} parent=0 // pred_fallthru
    _
  // Predicated region
  $region26: #{deep_q_network.1} parent=0 // pred_check
    _
  $region27: #{deep_q_network.1} parent=0 // pred_check_branch
    %198 = sbr.rel (0) target = $region29
  $region28: #{deep_q_network.1} parent=0 // pred_region
    _
  $region29: #{deep_q_network.1} parent=0 // pred_fallthru
    _

</llo_original>
